<compile_context>
chip_gen: v5e
topology: v5e:2x2
jax: 0.10.0
libtpu: 0.0.40
codegen_flags: <defaults>
</compile_context>

<pallas_src>
import jax
import jax.numpy as jnp
import numpy as np
from jax.experimental import pallas as pl
from jax.experimental.pallas import tpu as pltpu

# ---- CrystalPolicy config (module defaults, small synthetic backbone) ----
NUM_SG = 230
LAT_DIM, LAT_COMP = 6, 1
ATOM_DIM, ATOM_COMP = 3, 1
N_ELEMENT = 8
MIN_BETA, MAX_BETA = 0.1, 2.0
HIDDEN_DIM = 64          # backbone hidden_dim
OUTPUT_DIM = 32          # backbone output_dim (= outlayer input, fused away)
SG_EMB_DIM = 64          # spacegroup_emb dim
PRETRAIN_DIM = 128
N_ATOMS = 4              # synthetic atom count
ATOM_FEAT = 4            # dim=4
PROB_OUTPUT = 1 + NUM_SG + LAT_DIM * LAT_COMP * 3 + ATOM_DIM * ATOM_COMP * 3 + N_ELEMENT  # 266
FEAT_IN = N_ATOMS * ATOM_FEAT + SG_EMB_DIM + LAT_DIM + PRETRAIN_DIM                       # 214

OFFSET = 1 + NUM_SG
POS = LAT_DIM * LAT_COMP
APOS = ATOM_DIM * ATOM_COMP
# alpha/beta logit column ranges (rescaled by max_beta*sigmoid(x)+min_beta)
LAT_AB_LO, LAT_AB_HI = OFFSET + POS, OFFSET + 3 * POS                  # [237, 249)
ATOM_AB_LO = OFFSET + 3 * POS + APOS                                   # 252
ATOM_AB_HI = OFFSET + 3 * POS + 3 * APOS                               # 258


def _round_up(n, m):
    return ((n + m - 1) // m) * m


# Lane-padded sizes (last-dim multiples of 128 for lane-dense MXU/VPU/store paths)
FEAT_PAD = _round_up(FEAT_IN, 128)       # 256
HIDDEN_PAD = 128                          # 64 -> 128
OUT_PAD = _round_up(PROB_OUTPUT, 128)     # 384


# ----------------------------------------------------------------------------
# Pallas kernel: 2-layer ReLU MLP + fused (w3@wout) linear + masked rescale
# ----------------------------------------------------------------------------
def crystal_policy_kernel(x_ref, w1_ref, b1_ref, w2_ref, b2_ref,
                          w34_ref, b34_ref, out_ref):
    # bf16 MXU matmuls with f32 accumulation; elementwise math stays f32.
    h = jnp.dot(x_ref[...], w1_ref[...],
                preferred_element_type=jnp.float32) + b1_ref[...]
    h = jnp.maximum(h, 0.0).astype(w2_ref.dtype)
    h = jnp.dot(h, w2_ref[...],
                preferred_element_type=jnp.float32) + b2_ref[...]
    h = jnp.maximum(h, 0.0).astype(w34_ref.dtype)
    raw = jnp.dot(h, w34_ref[...],
                  preferred_element_type=jnp.float32) + b34_ref[...]

    # In-kernel alpha/beta column mask (replaces a whole mask input DMA).
    col = jax.lax.broadcasted_iota(jnp.int32, raw.shape, 1)
    is_ab = ((col >= LAT_AB_LO) & (col < LAT_AB_HI)) | \
            ((col >= ATOM_AB_LO) & (col < ATOM_AB_HI))
    scaled = MAX_BETA * jax.nn.sigmoid(raw) + MIN_BETA
    out_ref[...] = jnp.where(is_ab, scaled, raw)


def _resident(shape):
    # Weight / bias blocks: same block for every grid step -> stay in VMEM.
    return pl.BlockSpec(shape, lambda i: (0, 0))


def run_kernel(x_pad, kp, batch_tile):
    Bp = x_pad.shape[0]
    grid = (Bp // batch_tile,)
    return pl.pallas_call(
        crystal_policy_kernel,
        out_shape=jax.ShapeDtypeStruct((Bp, OUT_PAD), jnp.float32),
        grid=grid,
        in_specs=[
            pl.BlockSpec((batch_tile, FEAT_PAD), lambda i: (i, 0)),   # x tile
            _resident((FEAT_PAD, HIDDEN_PAD)),                        # w1
            _resident((1, HIDDEN_PAD)),                               # b1
            _resident((HIDDEN_PAD, HIDDEN_PAD)),                      # w2
            _resident((1, HIDDEN_PAD)),                               # b2
            _resident((HIDDEN_PAD, OUT_PAD)),                         # w34 = w3@wout
            _resident((1, OUT_PAD)),                                  # b34
        ],
        out_specs=pl.BlockSpec((batch_tile, OUT_PAD), lambda i: (i, 0)),
        compiler_params=pltpu.CompilerParams(
            dimension_semantics=("parallel",)),
    )(x_pad, kp["w1"], kp["b1"], kp["w2"], kp["b2"], kp["w34"], kp["b34"])


def _pick_tile(B):
    if B >= 256:
        return 256
    if B >= 128:
        return 128
    return _round_up(max(B, 1), 8)


@jax.jit
def _forward_jit(atom, sg, lattice, fpretrain, kp):
    B = atom.shape[0]
    sg_e = kp["spacegroup_emb"][sg]                       # embedding gather (glue)
    x = jnp.concatenate([atom.reshape(B, -1), sg_e, lattice, fpretrain], axis=-1)

    tile = _pick_tile(B)
    Bp = _round_up(B, tile)
    x_pad = jnp.pad(x, ((0, Bp - B), (0, FEAT_PAD - FEAT_IN))).astype(jnp.bfloat16)

    out = run_kernel(x_pad, kp, tile)[:B, :PROB_OUTPUT]   # drop pad rows / cols

    base = OFFSET + 3 * POS
    return (out[:, 0],
            out[:, 1:1 + NUM_SG],
            out[:, OFFSET:OFFSET + POS].reshape(-1, LAT_DIM, LAT_COMP),
            out[:, OFFSET + POS:OFFSET + 2 * POS].reshape(-1, LAT_DIM, LAT_COMP),
            out[:, OFFSET + 2 * POS:OFFSET + 3 * POS].reshape(-1, LAT_DIM, LAT_COMP),
            out[:, base:base + APOS].reshape(-1, ATOM_DIM, ATOM_COMP),
            out[:, base + APOS:base + 2 * APOS].reshape(-1, ATOM_DIM, ATOM_COMP),
            out[:, base + 2 * APOS:base + 3 * APOS].reshape(-1, ATOM_DIM, ATOM_COMP),
            out[:, base + 3 * APOS:].reshape(-1, N_ELEMENT))


# ----------------------------------------------------------------------------
# Parameters
# ----------------------------------------------------------------------------
def make_params(key):
    ks = jax.random.split(key, 5)

    def lin(k, fan_in, fan_out):
        scale = 1.0 / np.sqrt(fan_in)
        return (jax.random.uniform(k, (fan_in, fan_out), jnp.float32, -scale, scale),
                jnp.zeros((1, fan_out), jnp.float32))

    w1, b1 = lin(ks[0], FEAT_IN, HIDDEN_DIM)
    w2, b2 = lin(ks[1], HIDDEN_DIM, HIDDEN_DIM)
    w3, b3 = lin(ks[2], HIDDEN_DIM, OUTPUT_DIM)
    wout, bout = lin(ks[3], OUTPUT_DIM, PROB_OUTPUT)
    sg_emb = jax.random.normal(ks[4], (NUM_SG, SG_EMB_DIM), jnp.float32) * 0.02

    # Offline fusion of the last two linears (no nonlinearity between them).
    w34 = w3 @ wout                 # (64, 266)
    b34 = b3 @ wout + bout          # (1, 266)

    def pad2(a, r, c):
        return jnp.pad(a, ((0, r - a.shape[0]), (0, c - a.shape[1])))

    kernel_params = {
        "w1": pad2(w1, FEAT_PAD, HIDDEN_PAD).astype(jnp.bfloat16),
        "b1": pad2(b1, 1, HIDDEN_PAD),
        "w2": pad2(w2, HIDDEN_PAD, HIDDEN_PAD).astype(jnp.bfloat16),
        "b2": pad2(b2, 1, HIDDEN_PAD),
        "w34": pad2(w34, HIDDEN_PAD, OUT_PAD).astype(jnp.bfloat16),
        "b34": pad2(b34, 1, OUT_PAD),
        "spacegroup_emb": sg_emb,
    }
    fp32_params = {"w1": w1, "b1": b1, "w2": w2, "b2": b2, "w3": w3, "b3": b3,
                   "wout": wout, "bout": bout, "spacegroup_emb": sg_emb}
    return {"kernel": kernel_params, "fp32": fp32_params}


def make_pfs0(batchsize, prob_output_param=231):
    z = lambda *shape: jnp.zeros(shape, jnp.float32)
    return {"logits": z(batchsize, prob_output_param - 1),
            "logits_exit": z(batchsize),
            "log_alpha_lattice": z(batchsize, LAT_DIM * LAT_COMP),
            "log_alpha_atom": z(batchsize, ATOM_DIM * ATOM_COMP),
            "log_beta_lattice": z(batchsize, LAT_DIM * LAT_COMP),
            "log_beta_atom": z(batchsize, ATOM_DIM * ATOM_COMP),
            "logits_atom": z(batchsize, ATOM_DIM * ATOM_COMP),
            "logits_lattice": z(batchsize, LAT_DIM * LAT_COMP),
            "logits_type": z(batchsize, N_ELEMENT)}


# ----------------------------------------------------------------------------
# Forward (mirrors CrystalPolicy.forward semantics; returns the 9-element list)
# ----------------------------------------------------------------------------
def crystal_policy_forward(s, params, pfs0=None):
    atom, sg, lattice, fpretrain = s
    if atom is None:
        # s0 branch: pure parameter reads + sigmoid rescale (no hot path).
        sigm = lambda t: MAX_BETA * jax.nn.sigmoid(t) + MIN_BETA
        return [pfs0["logits_exit"],
                pfs0["logits"],
                pfs0["logits_lattice"].reshape(-1, LAT_DIM, LAT_COMP),
                sigm(pfs0["log_alpha_lattice"]).reshape(-1, LAT_DIM, LAT_COMP),
                sigm(pfs0["log_beta_lattice"]).reshape(-1, LAT_DIM, LAT_COMP),
                pfs0["logits_atom"].reshape(-1, ATOM_DIM, ATOM_COMP),
                sigm(pfs0["log_alpha_atom"]).reshape(-1, ATOM_DIM, ATOM_COMP),
                sigm(pfs0["log_beta_atom"]).reshape(-1, ATOM_DIM, ATOM_COMP),
                pfs0["logits_type"].reshape(-1, N_ELEMENT)]
    return list(_forward_jit(atom, sg, lattice, fpretrain, params["kernel"]))


# ----------------------------------------------------------------------------
# References for the correctness checks
# ----------------------------------------------------------------------------
def _ab_mask_cols(ncols):
    col = np.arange(ncols)
    m = ((col >= LAT_AB_LO) & (col < LAT_AB_HI)) | \
        ((col >= ATOM_AB_LO) & (col < ATOM_AB_HI))
    return jnp.asarray(m)


def reference_f32(s, p):
    """Pure-f32, unfused, unpadded reference (original module math)."""
    atom, sg, lattice, fpretrain = s
    B = atom.shape[0]
    x = jnp.concatenate([atom.reshape(B, -1), p["spacegroup_emb"][sg],
                         lattice, fpretrain], axis=-1)
    h = jnp.maximum(x @ p["w1"] + p["b1"], 0.0)
    h = jnp.maximum(h @ p["w2"] + p["b2"], 0.0)
    feat = h @ p["w3"] + p["b3"]
    raw = feat @ p["wout"] + p["bout"]
    scaled = MAX_BETA * jax.nn.sigmoid(raw) + MIN_BETA
    return jnp.where(_ab_mask_cols(PROB_OUTPUT)[None, :], scaled, raw)


def emulate_kernel(s, params):
    """Pure-JAX emulation of the exact kernel math (bf16 matmuls, fused W34)."""
    kp = params["kernel"]
    atom, sg, lattice, fpretrain = s
    B = atom.shape[0]
    x = jnp.concatenate([atom.reshape(B, -1), kp["spacegroup_emb"][sg],
                         lattice, fpretrain], axis=-1)
    x = jnp.pad(x, ((0, 0), (0, FEAT_PAD - FEAT_IN))).astype(jnp.bfloat16)
    h = jnp.dot(x, kp["w1"], preferred_element_type=jnp.float32) + kp["b1"]
    h = jnp.maximum(h, 0.0).astype(jnp.bfloat16)
    h = jnp.dot(h, kp["w2"], preferred_element_type=jnp.float32) + kp["b2"]
    h = jnp.maximum(h, 0.0).astype(jnp.bfloat16)
    raw = jnp.dot(h, kp["w34"], preferred_element_type=jnp.float32) + kp["b34"]
    scaled = MAX_BETA * jax.nn.sigmoid(raw) + MIN_BETA
    out = jnp.where(_ab_mask_cols(OUT_PAD)[None, :], scaled, raw)
    return out[:, :PROB_OUTPUT]


if __name__ == "__main__":
    B = 8
    key = jax.random.PRNGKey(0)
    k_p, k_atom, k_sg, k_lat, k_pre = jax.random.split(key, 5)

    params = make_params(k_p)
    atom = jax.random.normal(k_atom, (B, N_ATOMS, ATOM_FEAT), jnp.float32)
    sg = jax.random.randint(k_sg, (B,), 0, NUM_SG)
    lattice = jax.random.uniform(k_lat, (B, LAT_DIM), jnp.float32)
    fpretrain = jax.random.normal(k_pre, (B, PRETRAIN_DIM), jnp.float32)
    s = (atom, sg, lattice, fpretrain)

    logits = crystal_policy_forward(s, params)
    logits = jax.block_until_ready(logits)

    got = jnp.concatenate(
        [logits[0][:, None], logits[1],
         logits[2].reshape(B, -1), logits[3].reshape(B, -1), logits[4].reshape(B, -1),
         logits[5].reshape(B, -1), logits[6].reshape(B, -1), logits[7].reshape(B, -1),
         logits[8]], axis=-1)
    assert got.shape == (B, PROB_OUTPUT)

    # Tight check: kernel matches a pure-JAX emulation of the same bf16/fused math.
    emu = jax.block_until_ready(emulate_kernel(s, params))
    np.testing.assert_allclose(np.asarray(got), np.asarray(emu), rtol=1e-4, atol=1e-4)

    # Semantic check: matches the original unfused f32 module math within bf16 precision.
    ref = jax.block_until_ready(reference_f32(s, params["fp32"]))
    np.testing.assert_allclose(np.asarray(got), np.asarray(ref), rtol=5e-2, atol=5e-2)

    # s0 branch (parameter reads only; plain JAX glue, no kernel needed).
    logits0 = jax.block_until_ready(
        crystal_policy_forward((None, None, None, None), params, make_pfs0(4)))
    assert logits0[1].shape == (4, 230)

    # TODO(synk): `to_dist` (torch.distributions construction) has no Pallas
    # equivalent; only the logits-producing forward is implemented.
    print("KERNEL_OK")
</pallas_src>

<mosaic_0001>
module attributes {stable_mosaic.version = 11 : i64} {
  func.func @crystal_policy_kernel(%arg0: i32, %arg1: memref<8x256xbf16, #tpu.memory_space<vmem>>, %arg2: memref<256x128xbf16, #tpu.memory_space<vmem>>, %arg3: memref<1x128xf32, #tpu.memory_space<vmem>>, %arg4: memref<128x128xbf16, #tpu.memory_space<vmem>>, %arg5: memref<1x128xf32, #tpu.memory_space<vmem>>, %arg6: memref<128x384xbf16, #tpu.memory_space<vmem>>, %arg7: memref<1x384xf32, #tpu.memory_space<vmem>>, %arg8: memref<8x384xf32, #tpu.memory_space<vmem>>) attributes {dimension_semantics = [#tpu.dimension_semantics<parallel>], iteration_bounds = array<i64: 1>, scalar_prefetch = 0 : i64, scratch_operands = 0 : i64, tpu.core_type = #tpu.core_type<tc>, window_params = [{transform_indices = @transform_0, window_bounds = array<i64: 8, 256>}, {pipeline_mode = #tpu.pipeline_mode<synchronous>, transform_indices = @transform_1, window_bounds = array<i64: 256, 128>}, {pipeline_mode = #tpu.pipeline_mode<synchronous>, transform_indices = @transform_2, window_bounds = array<i64: 1, 128>}, {pipeline_mode = #tpu.pipeline_mode<synchronous>, transform_indices = @transform_3, window_bounds = array<i64: 128, 128>}, {pipeline_mode = #tpu.pipeline_mode<synchronous>, transform_indices = @transform_4, window_bounds = array<i64: 1, 128>}, {pipeline_mode = #tpu.pipeline_mode<synchronous>, transform_indices = @transform_5, window_bounds = array<i64: 128, 384>}, {pipeline_mode = #tpu.pipeline_mode<synchronous>, transform_indices = @transform_6, window_bounds = array<i64: 1, 384>}, {transform_indices = @transform_7, window_bounds = array<i64: 8, 384>}]} {
    %c0 = arith.constant 0 : index
    %c0_0 = arith.constant 0 : index
    %0 = vector.load %arg1[%c0, %c0_0] : memref<8x256xbf16, #tpu.memory_space<vmem>>, vector<8x256xbf16>
    %c0_1 = arith.constant 0 : index
    %c0_2 = arith.constant 0 : index
    %1 = vector.load %arg2[%c0_1, %c0_2] : memref<256x128xbf16, #tpu.memory_space<vmem>>, vector<256x128xbf16>
    %cst = arith.constant dense<0.000000e+00> : vector<8x128xf32>
    %2 = tpu.matmul %0, %1, %cst {dimension_numbers = #tpu.dot_dimension_numbers<[1], [0], [0], [1], [0, 0, 1, 1], [], []>} : vector<8x256xbf16>, vector<256x128xbf16>, vector<8x128xf32> -> vector<8x128xf32>
    %c0_3 = arith.constant 0 : index
    %c0_4 = arith.constant 0 : index
    %3 = vector.load %arg3[%c0_3, %c0_4] : memref<1x128xf32, #tpu.memory_space<vmem>>, vector<1x128xf32>
    %4 = vector.broadcast %3 : vector<1x128xf32> to vector<8x128xf32>
    %5 = arith.addf %2, %4 : vector<8x128xf32>
    %cst_5 = arith.constant 0.000000e+00 : f32
    %6 = vector.broadcast %cst_5 : f32 to vector<8x128xf32>
    %7 = arith.maximumf %5, %6 : vector<8x128xf32>
    %8 = arith.truncf %7 : vector<8x128xf32> to vector<8x128xbf16>
    %c0_6 = arith.constant 0 : index
    %c0_7 = arith.constant 0 : index
    %9 = vector.load %arg4[%c0_6, %c0_7] : memref<128x128xbf16, #tpu.memory_space<vmem>>, vector<128x128xbf16>
    %cst_8 = arith.constant dense<0.000000e+00> : vector<8x128xf32>
    %10 = tpu.matmul %8, %9, %cst_8 {dimension_numbers = #tpu.dot_dimension_numbers<[1], [0], [0], [1], [0, 0, 1, 1], [], []>} : vector<8x128xbf16>, vector<128x128xbf16>, vector<8x128xf32> -> vector<8x128xf32>
    %c0_9 = arith.constant 0 : index
    %c0_10 = arith.constant 0 : index
    %11 = vector.load %arg5[%c0_9, %c0_10] : memref<1x128xf32, #tpu.memory_space<vmem>>, vector<1x128xf32>
    %12 = vector.broadcast %11 : vector<1x128xf32> to vector<8x128xf32>
    %13 = arith.addf %10, %12 : vector<8x128xf32>
    %cst_11 = arith.constant 0.000000e+00 : f32
    %14 = vector.broadcast %cst_11 : f32 to vector<8x128xf32>
    %15 = arith.maximumf %13, %14 : vector<8x128xf32>
    %16 = arith.truncf %15 : vector<8x128xf32> to vector<8x128xbf16>
    %c0_12 = arith.constant 0 : index
    %c0_13 = arith.constant 0 : index
    %17 = vector.load %arg6[%c0_12, %c0_13] : memref<128x384xbf16, #tpu.memory_space<vmem>>, vector<128x384xbf16>
    %cst_14 = arith.constant dense<0.000000e+00> : vector<8x384xf32>
    %18 = tpu.matmul %16, %17, %cst_14 {dimension_numbers = #tpu.dot_dimension_numbers<[1], [0], [0], [1], [0, 0, 1, 1], [], []>} : vector<8x128xbf16>, vector<128x384xbf16>, vector<8x384xf32> -> vector<8x384xf32>
    %c0_15 = arith.constant 0 : index
    %c0_16 = arith.constant 0 : index
    %19 = vector.load %arg7[%c0_15, %c0_16] : memref<1x384xf32, #tpu.memory_space<vmem>>, vector<1x384xf32>
    %20 = vector.broadcast %19 : vector<1x384xf32> to vector<8x384xf32>
    %21 = arith.addf %18, %20 : vector<8x384xf32>
    %22 = tpu.iota {dimensions = array<i32: 1>} : vector<8x384xi32>
    %c237_i32 = arith.constant 237 : i32
    %23 = vector.broadcast %c237_i32 : i32 to vector<8x384xi32>
    %24 = arith.cmpi sge, %22, %23 : vector<8x384xi32>
    %c249_i32 = arith.constant 249 : i32
    %25 = vector.broadcast %c249_i32 : i32 to vector<8x384xi32>
    %26 = arith.cmpi slt, %22, %25 : vector<8x384xi32>
    %27 = arith.andi %24, %26 : vector<8x384xi1>
    %c252_i32 = arith.constant 252 : i32
    %28 = vector.broadcast %c252_i32 : i32 to vector<8x384xi32>
    %29 = arith.cmpi sge, %22, %28 : vector<8x384xi32>
    %c258_i32 = arith.constant 258 : i32
    %30 = vector.broadcast %c258_i32 : i32 to vector<8x384xi32>
    %31 = arith.cmpi slt, %22, %30 : vector<8x384xi32>
    %32 = arith.andi %29, %31 : vector<8x384xi1>
    %33 = arith.ori %27, %32 : vector<8x384xi1>
    %34 = arith.negf %21 : vector<8x384xf32>
    %35 = math.exp %34 : vector<8x384xf32>
    %cst_17 = arith.constant 1.000000e+00 : f32
    %36 = vector.broadcast %cst_17 : f32 to vector<8x384xf32>
    %37 = arith.addf %36, %35 : vector<8x384xf32>
    %38 = arith.divf %36, %37 : vector<8x384xf32>
    %cst_18 = arith.constant 2.000000e+00 : f32
    %39 = vector.broadcast %cst_18 : f32 to vector<8x384xf32>
    %40 = arith.mulf %39, %38 : vector<8x384xf32>
    %cst_19 = arith.constant 1.000000e-01 : f32
    %41 = vector.broadcast %cst_19 : f32 to vector<8x384xf32>
    %42 = arith.addf %40, %41 : vector<8x384xf32>
    %43 = arith.select %33, %42, %21 : vector<8x384xi1>, vector<8x384xf32>
    %c0_20 = arith.constant 0 : index
    %c0_21 = arith.constant 0 : index
    %44 = vector.load %arg8[%c0_20, %c0_21] : memref<8x384xf32, #tpu.memory_space<vmem>>, vector<8x384xf32>
    tpu.vector_store %arg8[%c0_20, %c0_21], %43 {strides = array<i32>} : memref<8x384xf32, #tpu.memory_space<vmem>>, vector<8x384xf32>,
    return
  }
  func.func @transform_0(%arg0: i32) -> (i32, i32) {
    %c0_i32 = arith.constant 0 : i32
    %c0_i32_0 = arith.constant 0 : i32
    return %arg0, %c0_i32 : i32, i32
  }
  func.func @transform_1(%arg0: i32) -> (i32, i32) {
    %c0_i32 = arith.constant 0 : i32
    %c0_i32_0 = arith.constant 0 : i32
    %c0_i32_1 = arith.constant 0 : i32
    return %c0_i32, %c0_i32_0 : i32, i32
  }
  func.func @transform_2(%arg0: i32) -> (i32, i32) {
    %c0_i32 = arith.constant 0 : i32
    %c0_i32_0 = arith.constant 0 : i32
    %c0_i32_1 = arith.constant 0 : i32
    return %c0_i32, %c0_i32_0 : i32, i32
  }
  func.func @transform_3(%arg0: i32) -> (i32, i32) {
    %c0_i32 = arith.constant 0 : i32
    %c0_i32_0 = arith.constant 0 : i32
    %c0_i32_1 = arith.constant 0 : i32
    return %c0_i32, %c0_i32_0 : i32, i32
  }
  func.func @transform_4(%arg0: i32) -> (i32, i32) {
    %c0_i32 = arith.constant 0 : i32
    %c0_i32_0 = arith.constant 0 : i32
    %c0_i32_1 = arith.constant 0 : i32
    return %c0_i32, %c0_i32_0 : i32, i32
  }
  func.func @transform_5(%arg0: i32) -> (i32, i32) {
    %c0_i32 = arith.constant 0 : i32
    %c0_i32_0 = arith.constant 0 : i32
    %c0_i32_1 = arith.constant 0 : i32
    return %c0_i32, %c0_i32_0 : i32, i32
  }
  func.func @transform_6(%arg0: i32) -> (i32, i32) {
    %c0_i32 = arith.constant 0 : i32
    %c0_i32_0 = arith.constant 0 : i32
    %c0_i32_1 = arith.constant 0 : i32
    return %c0_i32, %c0_i32_0 : i32, i32
  }
  func.func @transform_7(%arg0: i32) -> (i32, i32) {
    %c0_i32 = arith.constant 0 : i32
    %c0_i32_0 = arith.constant 0 : i32
    return %arg0, %c0_i32 : i32, i32
  }
}

</mosaic_0001>

<llo_original>
// kernel: _forward_jit.1
$region0: #{_forward_jit.1}
  #allocation0 [shape = 'u32[]', space=smem, size = 0x4, offset = 0x4, fixed_abs, tag = 'smem constant byte address 0x4 - core index']
  #allocation1 [shape = 'u32[72,128]{1,0:T(1,128)}', space=vmem, size = 0x9000, scoped, tag = 'internal scratch']
  %s0 = inlined_call_operand.vmem [shape: bf16[8,256], index: 0, kind: input, shape index: {}]
  %s1 = inlined_call_operand.hbm [shape: bf16[256,128], index: 1, kind: input, shape index: {}]
  %s2 = inlined_call_operand.vmem [shape: f32[1,128], index: 2, kind: input, shape index: {}]
  %s3 = inlined_call_operand.vmem [shape: bf16[128,128], index: 3, kind: input, shape index: {}]
  %s4 = inlined_call_operand.vmem [shape: f32[1,128], index: 4, kind: input, shape index: {}]
  %s5 = inlined_call_operand.vmem [shape: bf16[128,384], index: 5, kind: input, shape index: {}]
  %s6 = inlined_call_operand.vmem [shape: f32[1,384], index: 6, kind: input, shape index: {}]
  %s7 = inlined_call_operand.vmem [shape: f32[8,384], index: 7, kind: output, shape index: {}]
  %s8 = sld [smem:[#allocation0]]
  $region42: #{_forward_jit.1} parent=0
    _
  %s10 = ssub.s32 1, %s8
  %s11 = scalar_select 0, %s10, %s8
  $region1: #{_forward_jit.1} parent=0
    #allocation2 [shape = 'u8[65536]{0}', space=vmem, size = 0x10000, scoped, tag = 'input window, operand 1, single buffered']
    #allocation3 [shape = 's32[1]{0}', space=sflag, size = 0x4, scoped, tag = 'scoped memory for _forward_jit.1']
    %12 = vsyncpa [#allocation3], 0
    // Predicated region
    $region2: #{_forward_jit.1} parent=1 // pred_check
      _
    $region3: #{_forward_jit.1} parent=1 // pred_check_branch
      %14 = sbr.rel (0) target = $region5
    $region4: #{_forward_jit.1} parent=1 // pred_region
      _
    $region5: #{_forward_jit.1} parent=1 // pred_fallthru
      _
    // Predicated region
    $region6: #{_forward_jit.1} parent=1 // pred_check
      _
    $region7: #{_forward_jit.1} parent=1 // pred_check_branch
      %16 = sbr.rel (0) target = $region9
    $region8: #{_forward_jit.1} parent=1 // pred_region
      %18 = vsyncadd [#allocation3], 0
      %s19 = sshll.u32 %s1, 4
      %s20 = int_to_ptr.hbm [resolvable:$true] %s19
      %s21 = sshll.u32 [#allocation2], 4
      %s22 = int_to_ptr.vmem [resolvable:$true] %s21
      %27 = dma.hbm_to_vmem [thread:$0]  %s20, 2048, %s22, [#allocation3], 64, 64, 4
    $region9: #{_forward_jit.1} parent=1 // pred_fallthru
      _
    // Predicated region
    $region10: #{_forward_jit.1} parent=1 // pred_check
      _
    $region11: #{_forward_jit.1} parent=1 // pred_check_branch
      %29 = sbr.rel (0) target = $region13
    $region12: #{_forward_jit.1} parent=1 // pred_region
      _
    $region13: #{_forward_jit.1} parent=1 // pred_fallthru
      _
    // Predicated region
    $region14: #{_forward_jit.1} parent=1 // pred_check
      _
    $region15: #{_forward_jit.1} parent=1 // pred_check_branch
      %31 = sbr.rel (0) target = $region17
    $region16: #{_forward_jit.1} parent=1 // pred_region
      _
    $region17: #{_forward_jit.1} parent=1 // pred_fallthru
      _
    // Predicated region
    $region18: #{_forward_jit.1} parent=1 // pred_check
      _
    $region19: #{_forward_jit.1} parent=1 // pred_check_branch
      %33 = sbr.rel (0) target = $region21
    $region20: #{_forward_jit.1} parent=1 // pred_region
      _
    $region21: #{_forward_jit.1} parent=1 // pred_fallthru
      _
    // Predicated region
    $region22: #{_forward_jit.1} parent=1 // pred_check
      _
    $region23: #{_forward_jit.1} parent=1 // pred_check_branch
      %35 = sbr.rel (0) target = $region25
    $region24: #{_forward_jit.1} parent=1 // pred_region
      _
    $region25: #{_forward_jit.1} parent=1 // pred_fallthru
      _
    // Predicated region
    $region26: #{_forward_jit.1} parent=1 // pred_check
      _
    $region27: #{_forward_jit.1} parent=1 // pred_check_branch
      %37 = sbr.rel (0) target = $region29
    $region28: #{_forward_jit.1} parent=1 // pred_region
      _
    $region29: #{_forward_jit.1} parent=1 // pred_fallthru
      _
    // Predicated region
    $region30: #{_forward_jit.1} parent=1 // pred_check
      _
    $region31: #{_forward_jit.1} parent=1 // pred_check_branch
      %39 = sbr.rel (0) target = $region33
    $region32: #{_forward_jit.1} parent=1 // pred_region
      %41 = dma.done [#allocation3], 2048
    $region33: #{_forward_jit.1} parent=1 // pred_fallthru
      _
    %v42 = vld [vmem:[%s0] sm:$0xff]
    %v43 = vld [vmem:[#allocation2] sm:$0xf]
    %v44 = vld [vmem:[#allocation2 + $0x4] sm:$0xf]
    %v45 = vld [vmem:[#allocation2 + $0x8] sm:$0xf]
    %v46 = vld [vmem:[#allocation2 + $0xc] sm:$0xf]
    %v47 = vld [vmem:[#allocation2 + $0x10] sm:$0xf]
    %v48 = vld [vmem:[#allocation2 + $0x14] sm:$0xf]
    %v49 = vld [vmem:[#allocation2 + $0x18] sm:$0xf]
    %v50 = vld [vmem:[#allocation2 + $0x1c] sm:$0xf]
    %v51 = vld [vmem:[#allocation2 + $0x20] sm:$0xf]
    %v52 = vld [vmem:[#allocation2 + $0x24] sm:$0xf]
    %v53 = vld [vmem:[#allocation2 + $0x28] sm:$0xf]
    %v54 = vld [vmem:[#allocation2 + $0x2c] sm:$0xf]
    %v55 = vld [vmem:[#allocation2 + $0x30] sm:$0xf]
    %v56 = vld [vmem:[#allocation2 + $0x34] sm:$0xf]
    %v57 = vld [vmem:[#allocation2 + $0x38] sm:$0xf]
    %v58 = vld [vmem:[#allocation2 + $0x3c] sm:$0xf]
    %v59 = vld [vmem:[#allocation2 + $0x40] sm:$0xf]
    %v60 = vld [vmem:[#allocation2 + $0x44] sm:$0xf]
    %v61 = vld [vmem:[#allocation2 + $0x48] sm:$0xf]
    %v62 = vld [vmem:[#allocation2 + $0x4c] sm:$0xf]
    %v63 = vld [vmem:[#allocation2 + $0x50] sm:$0xf]
    %v64 = vld [vmem:[#allocation2 + $0x54] sm:$0xf]
    %v65 = vld [vmem:[#allocation2 + $0x58] sm:$0xf]
    %v66 = vld [vmem:[#allocation2 + $0x5c] sm:$0xf]
    %v67 = vld [vmem:[#allocation2 + $0x60] sm:$0xf]
    %v68 = vld [vmem:[#allocation2 + $0x64] sm:$0xf]
    %v69 = vld [vmem:[#allocation2 + $0x68] sm:$0xf]
    %v70 = vld [vmem:[#allocation2 + $0x6c] sm:$0xf]
    %v71 = vld [vmem:[#allocation2 + $0x70] sm:$0xf]
    %v72 = vld [vmem:[#allocation2 + $0x74] sm:$0xf]
    %v73 = vld [vmem:[#allocation2 + $0x78] sm:$0xf]
    %v74 = vld [vmem:[#allocation2 + $0x7c] sm:$0xf]
    %v75 = vld [vmem:[%s2] sm:$0x1]
    %v77 = vperm.slane %v75, 0
    %v80 = vunpack.c.l.b16 %v42
    %v81 = vunpack.c.h.b16 %v42
    %v82 = vpack.c.b16 %v80, %v80
    %v83 = vpack.c.b16 %v81, %v81
    %v118 = vunpack.c.l.b16 %v43
    %v119 = vunpack.c.l.b16 %v44
    %v120 = vunpack.c.l.b16 %v45
    %v121 = vunpack.c.l.b16 %v46
    %v122 = vunpack.c.l.b16 %v47
    %v123 = vunpack.c.l.b16 %v48
    %v124 = vunpack.c.l.b16 %v49
    %v125 = vunpack.c.l.b16 %v50
    %v126 = vunpack.c.l.b16 %v51
    %v127 = vunpack.c.l.b16 %v52
    %v128 = vunpack.c.l.b16 %v53
    %v129 = vunpack.c.l.b16 %v54
    %v130 = vunpack.c.l.b16 %v55
    %v131 = vunpack.c.l.b16 %v56
    %v132 = vunpack.c.l.b16 %v57
    %v133 = vunpack.c.l.b16 %v58
    %v134 = vunpack.c.l.b16 %v59
    %v135 = vunpack.c.l.b16 %v60
    %v136 = vunpack.c.l.b16 %v61
    %v137 = vunpack.c.l.b16 %v62
    %v138 = vunpack.c.l.b16 %v63
    %v139 = vunpack.c.l.b16 %v64
    %v140 = vunpack.c.l.b16 %v65
    %v141 = vunpack.c.l.b16 %v66
    %v142 = vunpack.c.l.b16 %v67
    %v143 = vunpack.c.l.b16 %v68
    %v144 = vunpack.c.l.b16 %v69
    %v145 = vunpack.c.l.b16 %v70
    %v146 = vunpack.c.l.b16 %v71
    %v147 = vunpack.c.l.b16 %v72
    %v148 = vunpack.c.l.b16 %v73
    %v149 = vunpack.c.l.b16 %v74
    %v150 = vpack.c.b16 %v119, %v118
    %v151 = vpack.c.b16 %v121, %v120
    %v152 = vpack.c.b16 %v123, %v122
    %v153 = vpack.c.b16 %v125, %v124
    %v154 = vpack.c.b16 %v127, %v126
    %v155 = vpack.c.b16 %v129, %v128
    %v156 = vpack.c.b16 %v131, %v130
    %v157 = vpack.c.b16 %v133, %v132
    %v158 = vpack.c.b16 %v135, %v134
    %v159 = vpack.c.b16 %v137, %v136
    %v160 = vpack.c.b16 %v139, %v138
    %v161 = vpack.c.b16 %v141, %v140
    %v162 = vpack.c.b16 %v143, %v142
    %v163 = vpack.c.b16 %v145, %v144
    %v164 = vpack.c.b16 %v147, %v146
    %v165 = vpack.c.b16 %v149, %v148
    %182 = vmatpush.bf16.msra.mxu0 %v157
    %183 = vmatpush.bf16.msra.mxu0 %v156
    %184 = vmatpush.bf16.msra.mxu0 %v155
    %185 = vmatpush.bf16.msra.mxu0 %v154
    %186 = vmatpush.bf16.msra.mxu0 %v153
    %187 = vmatpush.bf16.msra.mxu0 %v152
    %188 = vmatpush.bf16.msra.mxu0 %v151
    %189 = vmatpush.bf16.msra.mxu0 %v150
    %190 = vmatmul.bf16.gmra.mxu0 %v82
    %v191 = vpop.f32.mrf.mxu0
    %v192 = vadd.f32 %v77, %v191
    %v193 = vpop.f32.mrf.mxu0
    %194 = vdwg.mxu0
    %195 = vmatpush.bf16.msra.mxu0 %v165
    %196 = vmatpush.bf16.msra.mxu0 %v164
    %197 = vmatpush.bf16.msra.mxu0 %v163
    %198 = vmatpush.bf16.msra.mxu0 %v162
    %199 = vmatpush.bf16.msra.mxu0 %v161
    %200 = vmatpush.bf16.msra.mxu0 %v160
    %201 = vmatpush.bf16.msra.mxu0 %v159
    %202 = vmatpush.bf16.msra.mxu0 %v158
    %203 = vmatmul.bf16.gmra.mxu0 %v83
    %v204 = vpop.f32.mrf.mxu0
    %v205 = vadd.f32 %v192, %v204
    %v206 = vpop.f32.mrf.mxu0
    %207 = vdwg.mxu0
    %v208 = vmax.f32 %v205, 0.0
    %v209 = vpack.c.bf16 %v208, %v208
    %v210 = vld [vmem:[%s3] sm:$0xf]
    %v211 = vld [vmem:[%s3 + $0x4] sm:$0xf]
    %v212 = vld [vmem:[%s3 + $0x8] sm:$0xf]
    %v213 = vld [vmem:[%s3 + $0xc] sm:$0xf]
    %v214 = vld [vmem:[%s3 + $0x10] sm:$0xf]
    %v215 = vld [vmem:[%s3 + $0x14] sm:$0xf]
    %v216 = vld [vmem:[%s3 + $0x18] sm:$0xf]
    %v217 = vld [vmem:[%s3 + $0x1c] sm:$0xf]
    %v218 = vld [vmem:[%s3 + $0x20] sm:$0xf]
    %v219 = vld [vmem:[%s3 + $0x24] sm:$0xf]
    %v220 = vld [vmem:[%s3 + $0x28] sm:$0xf]
    %v221 = vld [vmem:[%s3 + $0x2c] sm:$0xf]
    %v222 = vld [vmem:[%s3 + $0x30] sm:$0xf]
    %v223 = vld [vmem:[%s3 + $0x34] sm:$0xf]
    %v224 = vld [vmem:[%s3 + $0x38] sm:$0xf]
    %v225 = vld [vmem:[%s3 + $0x3c] sm:$0xf]
    %v226 = vld [vmem:[%s4] sm:$0x1]
    %v228 = vperm.slane %v226, 0
    %v246 = vunpack.c.l.b16 %v210
    %v247 = vunpack.c.l.b16 %v211
    %v248 = vunpack.c.l.b16 %v212
    %v249 = vunpack.c.l.b16 %v213
    %v250 = vunpack.c.l.b16 %v214
    %v251 = vunpack.c.l.b16 %v215
    %v252 = vunpack.c.l.b16 %v216
    %v253 = vunpack.c.l.b16 %v217
    %v254 = vunpack.c.l.b16 %v218
    %v255 = vunpack.c.l.b16 %v219
    %v256 = vunpack.c.l.b16 %v220
    %v257 = vunpack.c.l.b16 %v221
    %v258 = vunpack.c.l.b16 %v222
    %v259 = vunpack.c.l.b16 %v223
    %v260 = vunpack.c.l.b16 %v224
    %v261 = vunpack.c.l.b16 %v225
    %v262 = vpack.c.b16 %v247, %v246
    %v263 = vpack.c.b16 %v249, %v248
    %v264 = vpack.c.b16 %v251, %v250
    %v265 = vpack.c.b16 %v253, %v252
    %v266 = vpack.c.b16 %v255, %v254
    %v267 = vpack.c.b16 %v257, %v256
    %v268 = vpack.c.b16 %v259, %v258
    %v269 = vpack.c.b16 %v261, %v260
    %278 = vmatpush.bf16.msra.mxu0 %v269
    %279 = vmatpush.bf16.msra.mxu0 %v268
    %280 = vmatpush.bf16.msra.mxu0 %v267
    %281 = vmatpush.bf16.msra.mxu0 %v266
    %282 = vmatpush.bf16.msra.mxu0 %v265
    %283 = vmatpush.bf16.msra.mxu0 %v264
    %284 = vmatpush.bf16.msra.mxu0 %v263
    %285 = vmatpush.bf16.msra.mxu0 %v262
    %286 = vmatmul.bf16.gmra.mxu0 %v209
    %v287 = vpop.f32.mrf.mxu0
    %v288 = vadd.f32 %v228, %v287
    %v289 = vpop.f32.mrf.mxu0
    %290 = vdwg.mxu0
    %v291 = vmax.f32 %v288, 0.0
    %v292 = vpack.c.bf16 %v291, %v291
    %v293 = vld [vmem:[%s5] sm:$0xff]
    %v294 = vld [vmem:[%s5 + $0x8] sm:$0xf]
    %v295 = vld [vmem:[%s5 + $0xc] sm:$0xff]
    %v296 = vld [vmem:[%s5 + $0x14] sm:$0xf]
    %v297 = vld [vmem:[%s5 + $0x18] sm:$0xff]
    %v298 = vld [vmem:[%s5 + $0x20] sm:$0xf]
    %v299 = vld [vmem:[%s5 + $0x24] sm:$0xff]
    %v300 = vld [vmem:[%s5 + $0x2c] sm:$0xf]
    %v301 = vld [vmem:[%s5 + $0x30] sm:$0xff]
    %v302 = vld [vmem:[%s5 + $0x38] sm:$0xf]
    %v303 = vld [vmem:[%s5 + $0x3c] sm:$0xff]
    %v304 = vld [vmem:[%s5 + $0x44] sm:$0xf]
    %v305 = vld [vmem:[%s5 + $0x48] sm:$0xff]
    %v306 = vld [vmem:[%s5 + $0x50] sm:$0xf]
    %v307 = vld [vmem:[%s5 + $0x54] sm:$0xff]
    %v308 = vld [vmem:[%s5 + $0x5c] sm:$0xf]
    %v309 = vld [vmem:[%s5 + $0x60] sm:$0xff]
    %v310 = vld [vmem:[%s5 + $0x68] sm:$0xf]
    %v311 = vld [vmem:[%s5 + $0x6c] sm:$0xff]
    %v312 = vld [vmem:[%s5 + $0x74] sm:$0xf]
    %v313 = vld [vmem:[%s5 + $0x78] sm:$0xff]
    %v314 = vld [vmem:[%s5 + $0x80] sm:$0xf]
    %v315 = vld [vmem:[%s5 + $0x84] sm:$0xff]
    %v316 = vld [vmem:[%s5 + $0x8c] sm:$0xf]
    %v317 = vld [vmem:[%s5 + $0x90] sm:$0xff]
    %v318 = vld [vmem:[%s5 + $0x98] sm:$0xf]
    %v319 = vld [vmem:[%s5 + $0x9c] sm:$0xff]
    %v320 = vld [vmem:[%s5 + $0xa4] sm:$0xf]
    %v321 = vld [vmem:[%s5 + $0xa8] sm:$0xff]
    %v322 = vld [vmem:[%s5 + $0xb0] sm:$0xf]
    %v323 = vld [vmem:[%s5 + $0xb4] sm:$0xff]
    %v324 = vld [vmem:[%s5 + $0xbc] sm:$0xf]
    %v325 = vld [vmem:[%s6] sm:$0x7]
    %v327 = vperm.slane %v325, 0
    %v328 = vperm.slane %v325, 1
    %v329 = vperm.slane %v325, 2
    %v365 = vunpack.c.l.b16 %v293
    %v366 = vunpack.c.h.b16 %v293
    %v367 = vunpack.c.l.b16 %v294
    %v368 = vunpack.c.l.b16 %v295
    %v369 = vunpack.c.h.b16 %v295
    %v370 = vunpack.c.l.b16 %v296
    %v371 = vunpack.c.l.b16 %v297
    %v372 = vunpack.c.h.b16 %v297
    %v373 = vunpack.c.l.b16 %v298
    %v374 = vunpack.c.l.b16 %v299
    %v375 = vunpack.c.h.b16 %v299
    %v376 = vunpack.c.l.b16 %v300
    %v377 = vunpack.c.l.b16 %v301
    %v378 = vunpack.c.h.b16 %v301
    %v379 = vunpack.c.l.b16 %v302
    %v380 = vunpack.c.l.b16 %v303
    %v381 = vunpack.c.h.b16 %v303
    %v382 = vunpack.c.l.b16 %v304
    %v383 = vunpack.c.l.b16 %v305
    %v384 = vunpack.c.h.b16 %v305
    %v385 = vunpack.c.l.b16 %v306
    %v386 = vunpack.c.l.b16 %v307
    %v387 = vunpack.c.h.b16 %v307
    %v388 = vunpack.c.l.b16 %v308
    %v389 = vunpack.c.l.b16 %v309
    %v390 = vunpack.c.h.b16 %v309
    %v391 = vunpack.c.l.b16 %v310
    %v392 = vunpack.c.l.b16 %v311
    %v393 = vunpack.c.h.b16 %v311
    %v394 = vunpack.c.l.b16 %v312
    %v395 = vunpack.c.l.b16 %v313
    %v396 = vunpack.c.h.b16 %v313
    %v397 = vunpack.c.l.b16 %v314
    %v398 = vunpack.c.l.b16 %v315
    %v399 = vunpack.c.h.b16 %v315
    %v400 = vunpack.c.l.b16 %v316
    %v401 = vunpack.c.l.b16 %v317
    %v402 = vunpack.c.h.b16 %v317
    %v403 = vunpack.c.l.b16 %v318
    %v404 = vunpack.c.l.b16 %v319
    %v405 = vunpack.c.h.b16 %v319
    %v406 = vunpack.c.l.b16 %v320
    %v407 = vunpack.c.l.b16 %v321
    %v408 = vunpack.c.h.b16 %v321
    %v409 = vunpack.c.l.b16 %v322
    %v410 = vunpack.c.l.b16 %v323
    %v411 = vunpack.c.h.b16 %v323
    %v412 = vunpack.c.l.b16 %v324
    %v413 = vpack.c.b16 %v368, %v365
    %v414 = vpack.c.b16 %v369, %v366
    %v415 = vpack.c.b16 %v370, %v367
    %v416 = vpack.c.b16 %v374, %v371
    %v417 = vpack.c.b16 %v375, %v372
    %v418 = vpack.c.b16 %v376, %v373
    %v419 = vpack.c.b16 %v380, %v377
    %v420 = vpack.c.b16 %v381, %v378
    %v421 = vpack.c.b16 %v382, %v379
    %v422 = vpack.c.b16 %v386, %v383
    %v423 = vpack.c.b16 %v387, %v384
    %v424 = vpack.c.b16 %v388, %v385
    %v425 = vpack.c.b16 %v392, %v389
    %v426 = vpack.c.b16 %v393, %v390
    %v427 = vpack.c.b16 %v394, %v391
    %v428 = vpack.c.b16 %v398, %v395
    %v429 = vpack.c.b16 %v399, %v396
    %v430 = vpack.c.b16 %v400, %v397
    %v431 = vpack.c.b16 %v404, %v401
    %v432 = vpack.c.b16 %v405, %v402
    %v433 = vpack.c.b16 %v406, %v403
    %v434 = vpack.c.b16 %v410, %v407
    %v435 = vpack.c.b16 %v411, %v408
    %v436 = vpack.c.b16 %v412, %v409
    %461 = vmatpush.bf16.msra.mxu0 %v434
    %462 = vmatpush.bf16.msra.mxu0 %v431
    %463 = vmatpush.bf16.msra.mxu0 %v428
    %464 = vmatpush.bf16.msra.mxu0 %v425
    %465 = vmatpush.bf16.msra.mxu0 %v422
    %466 = vmatpush.bf16.msra.mxu0 %v419
    %467 = vmatpush.bf16.msra.mxu0 %v416
    %468 = vmatpush.bf16.msra.mxu0 %v413
    %469 = vmatmul.bf16.gmra.mxu0 %v292
    %v470 = vpop.f32.mrf.mxu0
    %v471 = vadd.f32 %v327, %v470
    %v472 = vpop.f32.mrf.mxu0
    %473 = vdwg.mxu0
    %474 = vmatpush.bf16.msra.mxu0 %v435
    %475 = vmatpush.bf16.msra.mxu0 %v432
    %476 = vmatpush.bf16.msra.mxu0 %v429
    %477 = vmatpush.bf16.msra.mxu0 %v426
    %478 = vmatpush.bf16.msra.mxu0 %v423
    %479 = vmatpush.bf16.msra.mxu0 %v420
    %480 = vmatpush.bf16.msra.mxu0 %v417
    %481 = vmatpush.bf16.msra.mxu0 %v414
    %482 = vmatmul.bf16.gmra.mxu0 %v292
    %v483 = vpop.f32.mrf.mxu0
    %v484 = vadd.f32 %v328, %v483
    %v485 = vpop.f32.mrf.mxu0
    %486 = vdwg.mxu0
    %487 = vmatpush.bf16.msra.mxu0 %v436
    %488 = vmatpush.bf16.msra.mxu0 %v433
    %489 = vmatpush.bf16.msra.mxu0 %v430
    %490 = vmatpush.bf16.msra.mxu0 %v427
    %491 = vmatpush.bf16.msra.mxu0 %v424
    %492 = vmatpush.bf16.msra.mxu0 %v421
    %493 = vmatpush.bf16.msra.mxu0 %v418
    %494 = vmatpush.bf16.msra.mxu0 %v415
    %495 = vmatmul.bf16.gmra.mxu0 %v292
    %v496 = vpop.f32.mrf.mxu0
    %v497 = vadd.f32 %v329, %v496
    %v498 = vpop.f32.mrf.mxu0
    %499 = vdwg.mxu0
    %v500 = vlaneseq
    %v501 = vand.u32 %v500, 127
    %v502 = vadd.s32 %v501, 128
    %v503 = vadd.s32 %v501, 256
    %vm504 = vcmp.ge.s32.totalorder %v501, 237
    %vm505 = vcmp.ge.s32.totalorder %v502, 237
    %vm506 = vcmp.ge.s32.totalorder %v503, 237
    %vm507 = vcmp.lt.s32.totalorder %v501, 249
    %vm508 = vcmp.lt.s32.totalorder %v502, 249
    %vm509 = vcmp.lt.s32.totalorder %v503, 249
    %vm510 = vmand %vm504, %vm507
    %vm511 = vmand %vm505, %vm508
    %vm512 = vmand %vm506, %vm509
    %vm513 = vcmp.ge.s32.totalorder %v501, 252
    %vm514 = vcmp.ge.s32.totalorder %v502, 252
    %vm515 = vcmp.ge.s32.totalorder %v503, 252
    %vm516 = vcmp.lt.s32.totalorder %v501, 258
    %vm517 = vcmp.lt.s32.totalorder %v502, 258
    %vm518 = vcmp.lt.s32.totalorder %v503, 258
    %vm519 = vmand %vm513, %vm516
    %vm520 = vmand %vm514, %vm517
    %vm521 = vmand %vm515, %vm518
    %vm522 = vmor %vm510, %vm519
    %vm523 = vmor %vm511, %vm520
    %vm524 = vmor %vm512, %vm521
    %v525 = vxor.u32 %v471, 2147483648
    %v526 = vxor.u32 %v484, 2147483648
    %v527 = vxor.u32 %v497, 2147483648
    %v528 = vmul.f32 %v525, 1.442695
    %v529 = vpow.pop %v528
    %v530 = vmul.f32 %v526, 1.442695
    %v531 = vpow.pop %v530
    %v532 = vmul.f32 %v527, 1.442695
    %v533 = vpow.pop %v532
    %v534 = vadd.f32 %v529, 1.0
    %v535 = vadd.f32 %v531, 1.0
    %v536 = vadd.f32 %v533, 1.0
    %v537 = vrcp.pop %v534
    %v538 = vmul.f32 %v534, %v537
    %v539 = vsub.f32 1.0, %v538
    %v540 = vmul.f32 %v537, %v539
    %v541 = vadd.f32 %v537, %v540
    %vm542 = vweird.f32 %v534
    %vm543 = vweird.f32 %v537
    %vm544 = vmor %vm542, %vm543
    %v545 = vsel %vm544, %v537, %v541
    %v546 = vand.u32 2147483647, %v534
    %vm547 = vcmp.eq.f32.partialorder %v546, 8.507059e+37
    %v548 = vand.u32 %v534, 2147483648
    %v549 = vor.u32 1.1754944e-38, %v548
    %v550 = vsel %vm547, %v549, %v545
    %v551 = vmul.f32 1.0, %v550
    %v552 = vrcp.pop %v535
    %v553 = vmul.f32 %v535, %v552
    %v554 = vsub.f32 1.0, %v553
    %v555 = vmul.f32 %v552, %v554
    %v556 = vadd.f32 %v552, %v555
    %vm557 = vweird.f32 %v535
    %vm558 = vweird.f32 %v552
    %vm559 = vmor %vm557, %vm558
    %v560 = vsel %vm559, %v552, %v556
    %v561 = vand.u32 2147483647, %v535
    %vm562 = vcmp.eq.f32.partialorder %v561, 8.507059e+37
    %v563 = vand.u32 %v535, 2147483648
    %v564 = vor.u32 1.1754944e-38, %v563
    %v565 = vsel %vm562, %v564, %v560
    %v566 = vmul.f32 1.0, %v565
    %v567 = vrcp.pop %v536
    %v568 = vmul.f32 %v536, %v567
    %v569 = vsub.f32 1.0, %v568
    %v570 = vmul.f32 %v567, %v569
    %v571 = vadd.f32 %v567, %v570
    %vm572 = vweird.f32 %v536
    %vm573 = vweird.f32 %v567
    %vm574 = vmor %vm572, %vm573
    %v575 = vsel %vm574, %v567, %v571
    %v576 = vand.u32 2147483647, %v536
    %vm577 = vcmp.eq.f32.partialorder %v576, 8.507059e+37
    %v578 = vand.u32 %v536, 2147483648
    %v579 = vor.u32 1.1754944e-38, %v578
    %v580 = vsel %vm577, %v579, %v575
    %v581 = vmul.f32 1.0, %v580
    %v582 = vmul.f32 %v551, 2.0
    %v583 = vmul.f32 %v566, 2.0
    %v584 = vmul.f32 %v581, 2.0
    %v585 = vadd.f32 %v582, 0.1
    %v586 = vadd.f32 %v583, 0.1
    %v587 = vadd.f32 %v584, 0.1
    %v588 = vsel %vm522, %v585, %v471
    %v589 = vsel %vm523, %v586, %v484
    %v590 = vsel %vm524, %v587, %v497
    %591 = vst [vmem:[%s7] sm:$0xff] %v588
    %592 = vst [vmem:[%s7 + $0x8] sm:$0xff] %v589
    %593 = vst [vmem:[%s7 + $0x10] sm:$0xff] %v590
    // Predicated region
    $region34: #{_forward_jit.1} parent=1 // pred_check
      _
    $region35: #{_forward_jit.1} parent=1 // pred_check_branch
      %595 = sbr.rel (0) target = $region37
    $region36: #{_forward_jit.1} parent=1 // pred_region
      _
    $region37: #{_forward_jit.1} parent=1 // pred_fallthru
      _
    // Predicated region
    $region38: #{_forward_jit.1} parent=1 // pred_check
      _
    $region39: #{_forward_jit.1} parent=1 // pred_check_branch
      %597 = sbr.rel (0) target = $region41
    $region40: #{_forward_jit.1} parent=1 // pred_region
      _
    $region41: #{_forward_jit.1} parent=1 // pred_fallthru
      _
    %598 = vsyncpa [#allocation3], 1

</llo_original>
